<compile_context>
chip_gen: v6e
topology: v6e:2x2x1
jax: 0.10.0
libtpu: 0.0.40
codegen_flags: <defaults>
</compile_context>

<pallas_src>
import functools
import math

import jax
import jax.numpy as jnp
from jax.experimental import pallas as pl
from jax.experimental.pallas import tpu as pltpu

EPS = 1e-5  # PyTorch BatchNorm default eps


def _round_up(x, m):
    return (x + m - 1) // m * m


def _default_vmem_limit():
    """Per-generation scoped-VMEM budget: ~3/4 of physical, capped at 100 MiB."""
    cap = 128 * 1024 * 1024
    try:
        info = pltpu.get_tpu_info()
        cap = int(getattr(info, "vmem_capacity_bytes", cap) or cap)
    except Exception:
        pass
    return int(min(cap * 3 // 4, 100 * 1024 * 1024))


_VMEM_LIMIT = _default_vmem_limit()


# ----------------------------------------------------------------------------
# Pallas kernels
# ----------------------------------------------------------------------------
def _make_mm_kernel(*, relu, has_res, nk):
    """Tiled matmul: bf16 operands -> f32 acc, fused scale/shift(+res)(+ReLU)."""

    def kernel(a_ref, b_ref, sc_ref, sh_ref, *rest):
        idx = 0
        r_ref = None
        if has_res:
            r_ref = rest[idx]
            idx += 1
        o_ref = rest[idx]
        idx += 1
        acc_ref = rest[idx] if nk > 1 else None

        def epilogue(acc):
            y = acc * sc_ref[...] + sh_ref[...]
            if has_res:
                y = y + r_ref[...].astype(jnp.float32)
            if relu:
                y = jnp.maximum(y, 0.0)
            o_ref[...] = y.astype(o_ref.dtype)

        if nk == 1:
            # Full-K block: no accumulator round trip, write straight out.
            epilogue(jnp.dot(a_ref[...], b_ref[...],
                             preferred_element_type=jnp.float32))
        else:
            # Fallback for K > 4608 (not hit by ResNet50 shapes): keep an f32
            # scratch accumulator (output is bf16, so don't accumulate into it).
            @pl.when(pl.program_id(2) == 0)
            def _():
                acc_ref[...] = jnp.zeros_like(acc_ref)

            acc_ref[...] += jnp.dot(a_ref[...], b_ref[...],
                                    preferred_element_type=jnp.float32)

            @pl.when(pl.program_id(2) == pl.num_programs(2) - 1)
            def _():
                epilogue(acc_ref[...])

    return kernel


def _gap_kernel(x_ref, o_ref):
    o_ref[...] = jnp.mean(x_ref[...].astype(jnp.float32), axis=1)


# ----------------------------------------------------------------------------
# Matmul wrapper (called inside the jitted conv/linear wrappers)
# ----------------------------------------------------------------------------
def _matmul(a, b, scale, shift, residual, *, relu, out_dtype=jnp.bfloat16):
    """(M,K)@(K,N) * scale[N] + shift[N] [+ residual] [ReLU] -> out_dtype (M,N)."""
    M, K = a.shape
    K2, N = b.shape
    assert K == K2

    pN = _round_up(N, 128)
    tm = 256 if M >= 256 else _round_up(max(M, 1), 16)   # bf16 min tile = (16, 128)
    pM = _round_up(M, tm)
    pK = _round_up(K, 16)
    if pK <= 4608:
        tk = pK                     # full-K: single k step, no accumulator
    else:
        tk = 2304
        pK = _round_up(pK, tk)
    nk = pK // tk

    # tn scales with M: tiny-M deep layers take a fat lane-dense N tile, but we
    # keep >= 2 parallel grid steps so both v7x TensorCores get work.
    if pM // tm == 1 and pN >= 256:
        tn = min(pN // 2, 2048)
    else:
        tn = min(pN, 256)
    if pN % tn:
        tn = 128

    # VMEM feasibility: double-buffered bf16 A/B/out(+res) (+ f32 acc if nk>1).
    budget = (_VMEM_LIMIT * 4) // 5
    n_out_like = 2 if residual is not None else 1

    def _footprint(tn_):
        return (2 * 2 * (tm * tk + tk * tn_ + n_out_like * tm * tn_)
                + (tm * tn_ * 4 if nk > 1 else 0))

    while tn > 128 and _footprint(tn) > budget:
        tn = max(128, tn // 2)
        if pN % tn:
            tn = 128
            break

    a_p = a.astype(jnp.bfloat16)
    if (pM, pK) != (M, K):
        a_p = jnp.pad(a_p, ((0, pM - M), (0, pK - K)))
    b_p = b.astype(jnp.bfloat16)
    if (pK, pN) != (K, N):
        b_p = jnp.pad(b_p, ((0, pK - K), (0, pN - N)))
    sc_p = jnp.pad(scale.astype(jnp.float32), (0, pN - N)).reshape(1, pN)
    sh_p = jnp.pad(shift.astype(jnp.float32), (0, pN - N)).reshape(1, pN)

    if nk == 1:
        grid = (pM // tm, pN // tn)
        a_spec = pl.BlockSpec((tm, tk), lambda i, j: (i, 0))
        b_spec = pl.BlockSpec((tk, tn), lambda i, j: (0, j))
        v_spec = pl.BlockSpec((1, tn), lambda i, j: (0, j))
        r_spec = pl.BlockSpec((tm, tn), lambda i, j: (i, j))
        o_spec = pl.BlockSpec((tm, tn), lambda i, j: (i, j))
        sem = ("parallel", "parallel")
        scratch = []
    else:
        grid = (pM // tm, pN // tn, nk)
        a_spec = pl.BlockSpec((tm, tk), lambda i, j, k: (i, k))
        b_spec = pl.BlockSpec((tk, tn), lambda i, j, k: (k, j))
        v_spec = pl.BlockSpec((1, tn), lambda i, j, k: (0, j))
        r_spec = pl.BlockSpec((tm, tn), lambda i, j, k: (i, j))
        o_spec = pl.BlockSpec((tm, tn), lambda i, j, k: (i, j))
        sem = ("parallel", "parallel", "arbitrary")
        scratch = [pltpu.VMEM((tm, tn), jnp.float32)]

    in_specs = [a_spec, b_spec, v_spec, v_spec]
    inputs = [a_p, b_p, sc_p, sh_p]
    if residual is not None:
        r_p = residual.astype(jnp.bfloat16)            # residual travels in bf16 too
        if (pM, pN) != r_p.shape:
            r_p = jnp.pad(r_p, ((0, pM - M), (0, pN - N)))
        in_specs.append(r_spec)
        inputs.append(r_p)

    out = pl.pallas_call(
        _make_mm_kernel(relu=relu, has_res=residual is not None, nk=nk),
        out_shape=jax.ShapeDtypeStruct((pM, pN), out_dtype),
        grid_spec=pltpu.PrefetchScalarGridSpec(
            num_scalar_prefetch=0,
            grid=grid,
            in_specs=in_specs,
            out_specs=o_spec,
            scratch_shapes=scratch,
        ),
        compiler_params=pltpu.CompilerParams(
            dimension_semantics=sem,
            vmem_limit_bytes=_VMEM_LIMIT),
    )(*inputs)
    if (pM, pN) != (M, N):
        out = out[:M, :N]          # fused with the consumer reshape (same jit)
    return out


# ----------------------------------------------------------------------------
# Conv / Linear wrappers (jitted so im2col + cast + pad + slice fuse around the kernel)
# ----------------------------------------------------------------------------
def _im2col(x, ksize, stride, padding):
    """NHWC -> (N*OH*OW, k*k*C) patches, emitted directly in bf16."""
    N, H, W, C = x.shape
    xp = x.astype(jnp.bfloat16)
    if padding:
        xp = jnp.pad(xp, ((0, 0), (padding, padding), (padding, padding), (0, 0)))
    OH = (H + 2 * padding - ksize) // stride + 1
    OW = (W + 2 * padding - ksize) // stride + 1
    cols = []
    for i in range(ksize):
        for j in range(ksize):
            cols.append(xp[:, i:i + stride * OH:stride,
                           j:j + stride * OW:stride, :])
    cols = jnp.concatenate(cols, axis=-1) if len(cols) > 1 else cols[0]
    return cols.reshape(N * OH * OW, ksize * ksize * C), OH, OW


@functools.partial(jax.jit, static_argnames=("ksize", "stride", "padding", "relu"))
def conv_bn(x, w, scale, shift, *, ksize, stride, padding, relu):
    """Conv2d (+ folded BatchNorm2d) (+ ReLU) in NHWC -> bf16."""
    N = x.shape[0]
    a, OH, OW = _im2col(x, ksize, stride, padding)
    out = _matmul(a, w, scale, shift, None, relu=relu)
    return out.reshape(N, OH, OW, -1)


@functools.partial(jax.jit, static_argnames=("ksize", "stride", "padding"))
def conv_bn_add_relu(x, w, scale, shift, shortcut, *, ksize, stride, padding):
    """Conv2d + folded BN + residual add + ReLU fused in one matmul epilogue."""
    N = x.shape[0]
    a, OH, OW = _im2col(x, ksize, stride, padding)
    r = shortcut.reshape(a.shape[0], -1)
    out = _matmul(a, w, scale, shift, r, relu=True)
    return out.reshape(N, OH, OW, -1)


@functools.partial(jax.jit, static_argnames=("relu", "out_dtype"))
def linear_bn(x, w, scale, shift, *, relu, out_dtype=jnp.bfloat16):
    return _matmul(x, w, scale, shift, None, relu=relu, out_dtype=out_dtype)


# ----------------------------------------------------------------------------
# Pooling ops
# ----------------------------------------------------------------------------
@functools.partial(jax.jit, static_argnames=("ksize", "stride", "padding"))
def max_pool2d(x, *, ksize, stride, padding):
    """NHWC max pool as one fused XLA maximum tree (per perf review: the tiny
    row-tiled Pallas pooling kernel was pure grid-step overhead)."""
    N, H, W, C = x.shape
    xp = jnp.pad(x, ((0, 0), (padding, padding), (padding, padding), (0, 0)),
                 constant_values=-jnp.inf)
    OH = (H + 2 * padding - ksize) // stride + 1
    OW = (W + 2 * padding - ksize) // stride + 1
    out = None
    for i in range(ksize):
        for j in range(ksize):
            t = xp[:, i:i + stride * OH:stride, j:j + stride * OW:stride, :]
            out = t if out is None else jnp.maximum(out, t)
    return out


@jax.jit
def global_avg_pool(x):
    """adaptive_avg_pool2d(x, 1).squeeze() for NHWC -> (N, C) f32, single grid step."""
    N, H, W, C = x.shape
    x2 = x.reshape(N, H * W, C)
    return pl.pallas_call(
        _gap_kernel,
        out_shape=jax.ShapeDtypeStruct((N, C), jnp.float32),
        grid_spec=pltpu.PrefetchScalarGridSpec(
            num_scalar_prefetch=0,
            grid=(1,),
            in_specs=[pl.BlockSpec((N, H * W, C), lambda i: (0, 0, 0))],
            out_specs=pl.BlockSpec((N, C), lambda i: (0, 0)),
        ),
        compiler_params=pltpu.CompilerParams(
            dimension_semantics=("arbitrary",),
            vmem_limit_bytes=_VMEM_LIMIT),
    )(x2)


# ----------------------------------------------------------------------------
# Static ResNet50 architecture (strides live here, not in the param pytree)
# ----------------------------------------------------------------------------
RESNET50_LAYERS = {
    "layer1": [("down", (1, 1, 1, 1)), ("basic", None), ("basic", None)],
    "layer2": [("down", (1, 2, 1, 2)), ("basic", None), ("basic", None),
               ("down", (1, 1, 1, 1))],
    "layer3": [("down", (1, 2, 1, 2)), ("basic", None), ("basic", None),
               ("down", (1, 1, 1, 1)), ("down", (1, 1, 1, 1)), ("down", (1, 1, 1, 1))],
    "layer4": [("down", (1, 2, 1, 2)), ("down", (1, 1, 1, 1)), ("down", (1, 1, 1, 1))],
}
RESNET50_CHANNELS = {
    "layer1": (64, [64, 64, 256]),
    "layer2": (256, [128, 128, 512]),
    "layer3": (512, [256, 256, 1024]),
    "layer4": (1024, [512, 512, 2048]),
}


# ----------------------------------------------------------------------------
# Deterministic parameter init (synthetic; BN folded into scale/shift)
# ----------------------------------------------------------------------------
class KeyGen:
    def __init__(self, seed):
        self.key = jax.random.PRNGKey(seed)

    def __call__(self):
        self.key, k = jax.random.split(self.key)
        return k


def init_conv(kg, cin, cout, ksize, *, bn=True):
    fan_in = cin * ksize * ksize
    std = 1.0 / math.sqrt(fan_in)
    w = jax.random.normal(kg(), (ksize, ksize, cin, cout), jnp.float32) * std
    b = jax.random.uniform(kg(), (cout,), jnp.float32, -std, std)
    if bn:
        s = jnp.full((cout,), 1.0 / math.sqrt(1.0 + EPS), jnp.float32)
        shift = b * s          # gamma=1, beta=0, running_mean=0, running_var=1
    else:
        s = jnp.ones((cout,), jnp.float32)
        shift = b
    return {"w": w.reshape(ksize * ksize * cin, cout).astype(jnp.bfloat16),
            "scale": s, "shift": shift}


def init_linear(kg, fin, fout, *, bn=True):
    std = 1.0 / math.sqrt(fin)
    w = jax.random.normal(kg(), (fin, fout), jnp.float32) * std
    b = jax.random.uniform(kg(), (fout,), jnp.float32, -std, std)
    if bn:
        s = jnp.full((fout,), 1.0 / math.sqrt(1.0 + EPS), jnp.float32)
        shift = b * s
    else:
        s = jnp.ones((fout,), jnp.float32)
        shift = b
    return {"w": w.astype(jnp.bfloat16), "scale": s, "shift": shift}


def init_resnet50(kg, start_channels=3):
    p = {"conv1": init_conv(kg, start_channels, 64, 7, bn=False)}
    for name in ("layer1", "layer2", "layer3", "layer4"):
        cin, outs = RESNET50_CHANNELS[name]
        blocks = []
        for kind, _ in RESNET50_LAYERS[name]:
            blk = {"c1": init_conv(kg, cin, outs[0], 1),
                   "c2": init_conv(kg, outs[0], outs[1], 3),
                   "c3": init_conv(kg, outs[1], outs[2], 1)}
            if kind == "down":
                blk["extra"] = init_conv(kg, cin, outs[2], 1)
            blocks.append(blk)
            cin = outs[2]
        p[name] = blocks
    p["latent1"] = init_linear(kg, 2048, 1024, bn=True)
    p["latent2"] = init_linear(kg, 1024, 1024, bn=False)
    return p


def init_fusion(seed=1234):
    kg = KeyGen(seed)
    return {"ori_embed": init_resnet50(kg, 3),
            "gender": init_linear(kg, 1, 32, bn=True),
            "mlp1": init_linear(kg, 1024 + 32, 512, bn=True),
            "mlp2": init_linear(kg, 512, 1, bn=False)}


# ----------------------------------------------------------------------------
# Forward passes
# ----------------------------------------------------------------------------
def _apply_conv(x, p, *, ksize, stride, padding, relu):
    return conv_bn(x, p["w"], p["scale"], p["shift"],
                   ksize=ksize, stride=stride, padding=padding, relu=relu)


def _apply_conv_add_relu(x, p, shortcut, *, ksize, stride, padding):
    return conv_bn_add_relu(x, p["w"], p["scale"], p["shift"], shortcut,
                            ksize=ksize, stride=stride, padding=padding)


def apply_basic_block(x, p):
    out = _apply_conv(x, p["c1"], ksize=1, stride=1, padding=0, relu=True)
    out = _apply_conv(out, p["c2"], ksize=3, stride=1, padding=1, relu=True)
    # conv3 + bn3 + residual add + ReLU fused into one matmul epilogue.
    return _apply_conv_add_relu(out, p["c3"], x, ksize=1, stride=1, padding=0)


def apply_down_block(x, p, s):
    shortcut = _apply_conv(x, p["extra"], ksize=1, stride=s[3], padding=0, relu=False)
    out = _apply_conv(x, p["c1"], ksize=1, stride=s[0], padding=0, relu=True)
    out = _apply_conv(out, p["c2"], ksize=3, stride=s[1], padding=1, relu=True)
    return _apply_conv_add_relu(out, p["c3"], shortcut, ksize=1, stride=s[2], padding=0)


def apply_resnet50(x, p):
    # Reference ResNet50 does conv1 -> maxpool (no bn/relu after conv1).
    out = _apply_conv(x, p["conv1"], ksize=7, stride=2, padding=3, relu=False)
    out = max_pool2d(out, ksize=3, stride=2, padding=1)
    for name in ("layer1", "layer2", "layer3", "layer4"):
        for (kind, s), bp in zip(RESNET50_LAYERS[name], p[name]):
            out = apply_down_block(out, bp, s) if kind == "down" else apply_basic_block(out, bp)
    feat = global_avg_pool(out)                                       # (N, 2048) f32
    h = linear_bn(feat, p["latent1"]["w"], p["latent1"]["scale"],
                  p["latent1"]["shift"], relu=True)
    return linear_bn(h, p["latent2"]["w"], p["latent2"]["scale"],
                     p["latent2"]["shift"], relu=False)               # (N, 1024) bf16


def fusion_ori_grad_forward(params, ori, grad, gender):
    """ori, grad: NCHW float32 (grad unused by the reference forward); gender: (N,1)."""
    del grad  # reference forward never uses it
    x = jnp.transpose(ori, (0, 2, 3, 1))                              # NCHW -> NHWC
    ori_feature = apply_resnet50(x, params["ori_embed"])
    g = linear_bn(gender, params["gender"]["w"], params["gender"]["scale"],
                  params["gender"]["shift"], relu=True)
    fused = jnp.concatenate([ori_feature, g], axis=-1)                # (N, 1056) bf16
    h = linear_bn(fused, params["mlp1"]["w"], params["mlp1"]["scale"],
                  params["mlp1"]["shift"], relu=True)
    return linear_bn(h, params["mlp2"]["w"], params["mlp2"]["scale"],
                     params["mlp2"]["shift"], relu=False,
                     out_dtype=jnp.float32)                           # (N, 1) f32


# ----------------------------------------------------------------------------
if __name__ == "__main__":
    key = jax.random.PRNGKey(0)
    k_ori, k_grad, k_gender = jax.random.split(key, 3)
    # Small shapes: batch=2, 3x32x32 images (enough spatial for the 5x stride-2 path).
    ori = jax.random.normal(k_ori, (2, 3, 32, 32), jnp.float32)
    grad = jax.random.normal(k_grad, (2, 3, 32, 32), jnp.float32)
    gender = jax.random.normal(k_gender, (2, 1), jnp.float32)

    params = init_fusion(seed=1234)
    out = fusion_ori_grad_forward(params, ori, grad, gender)
    out = jax.block_until_ready(out)
    assert out.shape == (2, 1), out.shape
    assert bool(jnp.all(jnp.isfinite(out)))
    print("KERNEL_OK")
</pallas_src>

<mosaic_0001>
module attributes {stable_mosaic.version = 11 : i64} {
  func.func @kernel(%arg0: i32, %arg1: i32, %arg2: memref<256x160xbf16, #tpu.memory_space<vmem>>, %arg3: memref<160x128xbf16, #tpu.memory_space<vmem>>, %arg4: memref<1x128xf32, #tpu.memory_space<vmem>>, %arg5: memref<1x128xf32, #tpu.memory_space<vmem>>, %arg6: memref<256x128xbf16, #tpu.memory_space<vmem>>) attributes {dimension_semantics = [#tpu.dimension_semantics<parallel>, #tpu.dimension_semantics<parallel>], iteration_bounds = array<i64: 2, 1>, scalar_prefetch = 0 : i64, scratch_operands = 0 : i64, tpu.core_type = #tpu.core_type<tc>, window_params = [{transform_indices = @transform_0, window_bounds = array<i64: 256, 160>}, {transform_indices = @transform_1, window_bounds = array<i64: 160, 128>}, {transform_indices = @transform_2, window_bounds = array<i64: 1, 128>}, {transform_indices = @transform_3, window_bounds = array<i64: 1, 128>}, {transform_indices = @transform_4, window_bounds = array<i64: 256, 128>}]} {
    %c0 = arith.constant 0 : index
    %c0_0 = arith.constant 0 : index
    %0 = vector.load %arg2[%c0, %c0_0] : memref<256x160xbf16, #tpu.memory_space<vmem>>, vector<256x160xbf16>
    %c0_1 = arith.constant 0 : index
    %c0_2 = arith.constant 0 : index
    %1 = vector.load %arg3[%c0_1, %c0_2] : memref<160x128xbf16, #tpu.memory_space<vmem>>, vector<160x128xbf16>
    %cst = arith.constant dense<0.000000e+00> : vector<256x128xf32>
    %2 = tpu.matmul %0, %1, %cst {dimension_numbers = #tpu.dot_dimension_numbers<[1], [0], [0], [1], [0, 0, 1, 1], [], []>} : vector<256x160xbf16>, vector<160x128xbf16>, vector<256x128xf32> -> vector<256x128xf32>
    %c0_3 = arith.constant 0 : index
    %c0_4 = arith.constant 0 : index
    %3 = vector.load %arg4[%c0_3, %c0_4] : memref<1x128xf32, #tpu.memory_space<vmem>>, vector<1x128xf32>
    %4 = vector.broadcast %3 : vector<1x128xf32> to vector<256x128xf32>
    %5 = arith.mulf %2, %4 : vector<256x128xf32>
    %c0_5 = arith.constant 0 : index
    %c0_6 = arith.constant 0 : index
    %6 = vector.load %arg5[%c0_5, %c0_6] : memref<1x128xf32, #tpu.memory_space<vmem>>, vector<1x128xf32>
    %7 = vector.broadcast %6 : vector<1x128xf32> to vector<256x128xf32>
    %8 = arith.addf %5, %7 : vector<256x128xf32>
    %9 = arith.truncf %8 : vector<256x128xf32> to vector<256x128xbf16>
    %c0_7 = arith.constant 0 : index
    %c0_8 = arith.constant 0 : index
    %10 = vector.load %arg6[%c0_7, %c0_8] : memref<256x128xbf16, #tpu.memory_space<vmem>>, vector<256x128xbf16>
    tpu.vector_store %arg6[%c0_7, %c0_8], %9 {strides = array<i32>} : memref<256x128xbf16, #tpu.memory_space<vmem>>, vector<256x128xbf16>,
    return
  }
  func.func @transform_0(%arg0: i32, %arg1: i32) -> (i32, i32) {
    %c0_i32 = arith.constant 0 : i32
    %c0_i32_0 = arith.constant 0 : i32
    return %arg0, %c0_i32 : i32, i32
  }
  func.func @transform_1(%arg0: i32, %arg1: i32) -> (i32, i32) {
    %c0_i32 = arith.constant 0 : i32
    %c0_i32_0 = arith.constant 0 : i32
    return %c0_i32, %arg1 : i32, i32
  }
  func.func @transform_2(%arg0: i32, %arg1: i32) -> (i32, i32) {
    %c0_i32 = arith.constant 0 : i32
    %c0_i32_0 = arith.constant 0 : i32
    return %c0_i32, %arg1 : i32, i32
  }
  func.func @transform_3(%arg0: i32, %arg1: i32) -> (i32, i32) {
    %c0_i32 = arith.constant 0 : i32
    %c0_i32_0 = arith.constant 0 : i32
    return %c0_i32, %arg1 : i32, i32
  }
  func.func @transform_4(%arg0: i32, %arg1: i32) -> (i32, i32) {
    %c0_i32 = arith.constant 0 : i32
    return %arg0, %arg1 : i32, i32
  }
}

</mosaic_0001>

<llo_original>
// kernel: conv_bn.1
$region0: #{conv_bn.1}
  #allocation0 [shape = 'u32[]', space=smem, size = 0x4, offset = 0x4, fixed_abs, tag = 'smem constant byte address 0x4 - core index']
  #allocation1 [shape = 'u32[144,128]{1,0:T(1,128)}', space=vmem, size = 0x12000, scoped, tag = 'internal scratch']
  %s0 = inlined_call_operand.vmem [shape: bf16[512,160], index: 0, kind: input, shape index: {}]
  %s1 = inlined_call_operand.vmem [shape: bf16[160,128], index: 1, kind: input, shape index: {}]
  %s2 = inlined_call_operand.vmem [shape: f32[1,128], index: 2, kind: input, shape index: {}]
  %s3 = inlined_call_operand.vmem [shape: f32[1,128], index: 3, kind: input, shape index: {}]
  %s4 = inlined_call_operand.hbm [shape: bf16[512,128], index: 4, kind: output, shape index: {}]
  %s5 = sld [smem:[#allocation0]]
  $region49: #{conv_bn.1} parent=0
    _
  %s7 = ssub.s32 1, %s5
  %s8 = scalar_select 0, %s7, %s5
  $region1: #{conv_bn.1} parent=0
    #allocation2 [shape = 'u8[131072]{0}', space=vmem, size = 0x20000, scoped, tag = 'output window, operand 0']
    #allocation3 [shape = 's32[2]{0}', space=sflag, size = 0x8, scoped, tag = 'scoped memory for conv_bn.1']
    %9 = vsyncpa [#allocation3], 0
    %s10 = scalar_lea.sflag [#allocation3], 1
    %11 = vsyncpa %s10, 0
    loop: start=0, step=1, limit=4
    $region2: #{conv_bn.1} parent=1 // loop_pre_header
      _
    $region3: #{conv_bn.1} parent=1 // loop_header
      %s13 = sphi 0, %s17
      %p14 = scmp.ge.s32.totalorder %s13, 4
      %s20 = sphi 0, %s32
      %s21 = sphi 0, %s28
      %s22 = sphi 0, %s20
      %s23 = sphi 0, %s21
      %s24 = sphi 0, %s22
      %s25 = sphi 0, %s23
      %s35 = sphi 0, %s37
      %s38 = sphi 0, %s35
      %s39 = sphi 0, %s38
      %s55 = sphi 0, %s39
      %s61 = sphi 0, %s63
      %s64 = sphi 0, %s61
      %s65 = sphi 0, %s64
      %s81 = sphi 0, %s65
      %s87 = sphi 0, %s89
      %s90 = sphi 0, %s87
      %s91 = sphi 0, %s90
      %s107 = sphi 0, %s91
      %s113 = sphi 0, %s115
      %s116 = sphi 0, %s113
      %s117 = sphi 0, %s116
      %s133 = sphi 0, %s117
      %s141 = sphi 0, %s143
      %s144 = sphi 0, %s141
      %s145 = sphi 0, %s144
      %s161 = sphi 0, %s145
    $region4: #{conv_bn.1} parent=1 // loop_header_branch
      %16 = sbr.rel (%p14) target = $region8
    $region5: #{conv_bn.1} parent=1 // loop_body
      %s18 = ssub.s32 %s13, 1
      %s19 = ssub.s32 %s13, 2
      %s26 = sadd.s32 1, %s21
      %p27 = scmp.ge.s32.totalorder %s26, 1
      %s28 = scalar_select %p27, 0, %s26
      %s29 = sadd.s32 1, %s20
      %s30 = scalar_select %p27, %s29, %s20
      %p31 = scmp.ge.s32.totalorder %s30, 2
      %s32 = scalar_select %p31, 0, %s30
      %s33 = ssub.s32 %s20, %s32
      %p34 = scmp.eq.s32.totalorder %s33, 0
      %s36 = sadd.s32 %s35, 1
      %s37 = scalar_select %p34, %s35, %s36
      %p40 = pneg %p34
      %p41 = scmp.eq.s32.totalorder %s13, 1
      %p42 = por %p40, %p41
      %p43 = scmp.ne.s32.totalorder %s35, %s38
      %p44 = scmp.eq.s32.totalorder %s13, 0
      %p45 = por %p43, %p44
      %p46 = scmp.ne.s32.totalorder %s35, %s38
      %p47 = scmp.eq.s32.totalorder %s18, 1
      %p48 = por %p46, %p47
      %p49 = scmp.ne.s32.totalorder %s38, %s39
      %p50 = scmp.eq.s32.totalorder %s18, 0
      %p51 = por %p49, %p50
      %p52 = scmp.ne.s32.totalorder %s38, %s39
      %p53 = scmp.eq.s32.totalorder %s19, 1
      %p54 = por %p52, %p53
      %p56 = scmp.ne.s32.totalorder %s39, %s55
      %p57 = scmp.eq.s32.totalorder %s19, 0
      %p58 = por %p56, %p57
      %s59 = ssub.s32 %s21, %s28
      %p60 = scmp.eq.s32.totalorder %s59, 0
      %s62 = sadd.s32 %s61, 1
      %s63 = scalar_select %p60, %s61, %s62
      %p66 = pneg %p60
      %p67 = scmp.eq.s32.totalorder %s13, 1
      %p68 = por %p66, %p67
      %p69 = scmp.ne.s32.totalorder %s61, %s64
      %p70 = scmp.eq.s32.totalorder %s13, 0
      %p71 = por %p69, %p70
      %p72 = scmp.ne.s32.totalorder %s61, %s64
      %p73 = scmp.eq.s32.totalorder %s18, 1
      %p74 = por %p72, %p73
      %p75 = scmp.ne.s32.totalorder %s64, %s65
      %p76 = scmp.eq.s32.totalorder %s18, 0
      %p77 = por %p75, %p76
      %p78 = scmp.ne.s32.totalorder %s64, %s65
      %p79 = scmp.eq.s32.totalorder %s19, 1
      %p80 = por %p78, %p79
      %p82 = scmp.ne.s32.totalorder %s65, %s81
      %p83 = scmp.eq.s32.totalorder %s19, 0
      %p84 = por %p82, %p83
      %s85 = ssub.s32 %s21, %s28
      %p86 = scmp.eq.s32.totalorder %s85, 0
      %s88 = sadd.s32 %s87, 1
      %s89 = scalar_select %p86, %s87, %s88
      %p92 = pneg %p86
      %p93 = scmp.eq.s32.totalorder %s13, 1
      %p94 = por %p92, %p93
      %p95 = scmp.ne.s32.totalorder %s87, %s90
      %p96 = scmp.eq.s32.totalorder %s13, 0
      %p97 = por %p95, %p96
      %p98 = scmp.ne.s32.totalorder %s87, %s90
      %p99 = scmp.eq.s32.totalorder %s18, 1
      %p100 = por %p98, %p99
      %p101 = scmp.ne.s32.totalorder %s90, %s91
      %p102 = scmp.eq.s32.totalorder %s18, 0
      %p103 = por %p101, %p102
      %p104 = scmp.ne.s32.totalorder %s90, %s91
      %p105 = scmp.eq.s32.totalorder %s19, 1
      %p106 = por %p104, %p105
      %p108 = scmp.ne.s32.totalorder %s91, %s107
      %p109 = scmp.eq.s32.totalorder %s19, 0
      %p110 = por %p108, %p109
      %s111 = ssub.s32 %s21, %s28
      %p112 = scmp.eq.s32.totalorder %s111, 0
      %s114 = sadd.s32 %s113, 1
      %s115 = scalar_select %p112, %s113, %s114
      %p118 = pneg %p112
      %p119 = scmp.eq.s32.totalorder %s13, 1
      %p120 = por %p118, %p119
      %p121 = scmp.ne.s32.totalorder %s113, %s116
      %p122 = scmp.eq.s32.totalorder %s13, 0
      %p123 = por %p121, %p122
      %p124 = scmp.ne.s32.totalorder %s113, %s116
      %p125 = scmp.eq.s32.totalorder %s18, 1
      %p126 = por %p124, %p125
      %p127 = scmp.ne.s32.totalorder %s116, %s117
      %p128 = scmp.eq.s32.totalorder %s18, 0
      %p129 = por %p127, %p128
      %p130 = scmp.ne.s32.totalorder %s116, %s117
      %p131 = scmp.eq.s32.totalorder %s19, 1
      %p132 = por %p130, %p131
      %p134 = scmp.ne.s32.totalorder %s117, %s133
      %p135 = scmp.eq.s32.totalorder %s19, 0
      %p136 = por %p134, %p135
      %s137 = ssub.s32 %s20, %s32
      %s138 = ssub.s32 %s21, %s28
      %s139 = sor.u32 %s137, %s138
      %p140 = scmp.eq.s32.totalorder %s139, 0
      %s142 = sadd.s32 %s141, 1
      %s143 = scalar_select %p140, %s141, %s142
      %p146 = pneg %p140
      %p147 = scmp.eq.s32.totalorder %s13, 1
      %p148 = por %p146, %p147
      %p149 = scmp.ne.s32.totalorder %s141, %s144
      %p150 = scmp.eq.s32.totalorder %s13, 0
      %p151 = por %p149, %p150
      %p152 = scmp.ne.s32.totalorder %s141, %s144
      %p153 = scmp.eq.s32.totalorder %s18, 1
      %p154 = por %p152, %p153
      %p155 = scmp.ne.s32.totalorder %s144, %s145
      %p156 = scmp.eq.s32.totalorder %s18, 0
      %p157 = por %p155, %p156
      %p158 = scmp.ne.s32.totalorder %s144, %s145
      %p159 = scmp.eq.s32.totalorder %s19, 1
      %p160 = por %p158, %p159
      %p162 = scmp.ne.s32.totalorder %s145, %s161
      %p163 = scmp.eq.s32.totalorder %s19, 0
      %p164 = por %p162, %p163
      %p165 = scmp.le.s32.totalorder 1, %s13
      %p166 = scmp.lt.s32.totalorder %s13, 3
      %p167 = pnand %p165, %p166
      %p168 = pneg %p167
      // Predicated region
      $region9: #{conv_bn.1} parent=5 // pred_check
        _
      $region10: #{conv_bn.1} parent=5 // pred_check_branch
        %170 = sbr.rel (%p167) target = $region12
      $region11: #{conv_bn.1} parent=5 // pred_region
        %s171 = ssub.s32 %s13, 1
        // Predicated region
        $region13: #{conv_bn.1} parent=11 // pred_check
          %p172 = pneg %p77
        $region14: #{conv_bn.1} parent=11 // pred_check_branch
          %174 = sbr.rel (%p172) target = $region16
        $region15: #{conv_bn.1} parent=11 // pred_region
          %p175 = scmp.lt.s32.totalorder %s23, 0
          %s176 = scalar_select %p175, %s23, 0
          %s177 = smul.addr %s176, 4
          %s178 = scalar_lea.vmem %s1, %s177
        $region16: #{conv_bn.1} parent=11 // pred_fallthru
          _
        // Predicated region
        $region17: #{conv_bn.1} parent=11 // pred_check
          %p179 = pneg %p103
        $region18: #{conv_bn.1} parent=11 // pred_check_branch
          %181 = sbr.rel (%p179) target = $region20
        $region19: #{conv_bn.1} parent=11 // pred_region
          %p182 = scmp.lt.s32.totalorder %s23, 0
          %s183 = scalar_select %p182, %s23, 0
          %s184 = scalar_lea.vmem %s2, %s183
        $region20: #{conv_bn.1} parent=11 // pred_fallthru
          _
        // Predicated region
        $region21: #{conv_bn.1} parent=11 // pred_check
          %p185 = pneg %p129
        $region22: #{conv_bn.1} parent=11 // pred_check_branch
          %187 = sbr.rel (%p185) target = $region24
        $region23: #{conv_bn.1} parent=11 // pred_region
          %p188 = scmp.lt.s32.totalorder %s23, 0
          %s189 = scalar_select %p188, %s23, 0
          %s190 = scalar_lea.vmem %s3, %s189
        $region24: #{conv_bn.1} parent=11 // pred_fallthru
          _
      $region12: #{conv_bn.1} parent=5 // pred_fallthru
        _
      %p191 = scmp.lt.s32.totalorder %s13, 2
      // Predicated region
      $region25: #{conv_bn.1} parent=5 // pred_check
        %p192 = pneg %p191
      $region26: #{conv_bn.1} parent=5 // pred_check_branch
        %194 = sbr.rel (%p192) target = $region28
      $region27: #{conv_bn.1} parent=5 // pred_region
        // Predicated region
        $region29: #{conv_bn.1} parent=27 // pred_check
          %p195 = pneg %p45
        $region30: #{conv_bn.1} parent=27 // pred_check_branch
          %197 = sbr.rel (%p195) target = $region32
        $region31: #{conv_bn.1} parent=27 // pred_region
          %s198 = smul.u32 32, %s20
          %p199 = scmp.lt.s32.totalorder %s198, 63
          %s200 = scalar_select %p199, %s198, 63
          %s201 = smul.addr %s200, 2
          %s202 = smul.addr %s201, 4
          %s203 = scalar_lea.vmem %s0, %s202
          %s204 = smul.u32 32, %s20
        $region32: #{conv_bn.1} parent=27 // pred_fallthru
          _
      $region28: #{conv_bn.1} parent=5 // pred_fallthru
        _
      %p205 = scmp.le.s32.totalorder 1, %s13
      %p206 = scmp.lt.s32.totalorder %s13, 3
      %p207 = pnand %p205, %p206
      %p208 = pneg %p207
      // Predicated region
      $region33: #{conv_bn.1} parent=5 // pred_check
        _
      $region34: #{conv_bn.1} parent=5 // pred_check_branch
        %210 = sbr.rel (%p207) target = $region36
      $region35: #{conv_bn.1} parent=5 // pred_region
        %s211 = ssub.s32 %s13, 1
        %s212 = smul.u32 32, %s22
        %p213 = scmp.lt.s32.totalorder %s212, 63
        %s214 = scalar_select %p213, %s212, 63
        %s215 = smul.addr %s214, 2
        %s216 = smul.addr %s215, 4
        %s217 = scalar_lea.vmem %s0, %s216
        %p218 = pneg %p51
        %p219 = pneg %p48
        %p220 = scmp.lt.s32.totalorder %s23, 0
        %s221 = scalar_select %p220, %s23, 0
        %s222 = smul.addr %s221, 4
        %s223 = scalar_lea.vmem %s1, %s222
        %p224 = pneg %p77
        %p225 = pneg %p74
        %p226 = scmp.lt.s32.totalorder %s23, 0
        %s227 = scalar_select %p226, %s23, 0
        %s228 = scalar_lea.vmem %s2, %s227
        %p229 = pneg %p103
        %p230 = pneg %p100
        %p231 = scmp.lt.s32.totalorder %s23, 0
        %s232 = scalar_select %p231, %s23, 0
        %s233 = scalar_lea.vmem %s3, %s232
        %p234 = pneg %p129
        %p235 = pneg %p126
        %p236 = pneg %p157
        %p237 = pneg %p154
        %s238 = sand.u32 %s144, 1
        %s239 = scalar_lea.sflag [#allocation3], %s238
        %s240 = sand.u32 %s144, 1
        %s241 = smul.addr %s240, 128
        %s242 = scalar_lea.vmem [#allocation2], %s241
        %s243 = smul.u32 32, %s22
        %p244 = scmp.lt.s32.totalorder %s243, 63
        %s245 = scalar_select %p244, %s243, 63
        %s246 = smul.addr %s245, 2
        %s247 = smul.addr %s246, 4
        %s248 = scalar_lea.vmem %s0, %s247
        %s249 = smul.u32 32, %s22
        %p250 = scmp.lt.s32.totalorder %s23, 0
        %s251 = scalar_select %p250, %s23, 0
        %s252 = smul.addr %s251, 4
        %s253 = scalar_lea.vmem %s1, %s252
        %p254 = scmp.lt.s32.totalorder %s23, 0
        %s255 = scalar_select %p254, %s23, 0
        %s256 = scalar_lea.vmem %s2, %s255
        %p257 = scmp.lt.s32.totalorder %s23, 0
        %s258 = scalar_select %p257, %s23, 0
        %s259 = scalar_lea.vmem %s3, %s258
        %s260 = smul.u32 32, %s22
        %v262 = vld [vmem:[%s248] sm:$0xff]
        %v263 = vld [vmem:[%s248 + $0x8] sm:$0xff]
        %v264 = vld [vmem:[%s248 + $0x10] sm:$0xff]
        %v265 = vld [vmem:[%s248 + $0x18] sm:$0xff]
        %v266 = vld [vmem:[%s248 + $0x20] sm:$0xff]
        %v267 = vld [vmem:[%s248 + $0x28] sm:$0xff]
        %v268 = vld [vmem:[%s248 + $0x30] sm:$0xff]
        %v269 = vld [vmem:[%s248 + $0x38] sm:$0xff]
        %v270 = vld [vmem:[%s248 + $0x40] sm:$0xff]
        %v271 = vld [vmem:[%s248 + $0x48] sm:$0xff]
        %v272 = vld [vmem:[%s248 + $0x50] sm:$0xff]
        %v273 = vld [vmem:[%s248 + $0x58] sm:$0xff]
        %v274 = vld [vmem:[%s248 + $0x60] sm:$0xff]
        %v275 = vld [vmem:[%s248 + $0x68] sm:$0xff]
        %v276 = vld [vmem:[%s248 + $0x70] sm:$0xff]
        %v277 = vld [vmem:[%s248 + $0x78] sm:$0xff]
        %v278 = vld [vmem:[%s248 + $0x80] sm:$0xff]
        %v279 = vld [vmem:[%s248 + $0x88] sm:$0xff]
        %v280 = vld [vmem:[%s248 + $0x90] sm:$0xff]
        %v281 = vld [vmem:[%s248 + $0x98] sm:$0xff]
        %v282 = vld [vmem:[%s248 + $0xa0] sm:$0xff]
        %v283 = vld [vmem:[%s248 + $0xa8] sm:$0xff]
        %v284 = vld [vmem:[%s248 + $0xb0] sm:$0xff]
        %v285 = vld [vmem:[%s248 + $0xb8] sm:$0xff]
        %v286 = vld [vmem:[%s248 + $0xc0] sm:$0xff]
        %v287 = vld [vmem:[%s248 + $0xc8] sm:$0xff]
        %v288 = vld [vmem:[%s248 + $0xd0] sm:$0xff]
        %v289 = vld [vmem:[%s248 + $0xd8] sm:$0xff]
        %v290 = vld [vmem:[%s248 + $0xe0] sm:$0xff]
        %v291 = vld [vmem:[%s248 + $0xe8] sm:$0xff]
        %v292 = vld [vmem:[%s248 + $0xf0] sm:$0xff]
        %v293 = vld [vmem:[%s248 + $0xf8] sm:$0xff]
        %v294 = vld [vmem:[%s253] sm:$0xf]
        %v295 = vld [vmem:[%s253 + $0x4] sm:$0xf]
        %v296 = vld [vmem:[%s253 + $0x8] sm:$0xf]
        %v297 = vld [vmem:[%s253 + $0xc] sm:$0xf]
        %v298 = vld [vmem:[%s253 + $0x10] sm:$0xf]
        %v299 = vld [vmem:[%s253 + $0x14] sm:$0xf]
        %v300 = vld [vmem:[%s253 + $0x18] sm:$0xf]
        %v301 = vld [vmem:[%s253 + $0x1c] sm:$0xf]
        %v302 = vld [vmem:[%s253 + $0x20] sm:$0xf]
        %v303 = vld [vmem:[%s253 + $0x24] sm:$0xf]
        %v304 = vld [vmem:[%s253 + $0x28] sm:$0xf]
        %v305 = vld [vmem:[%s253 + $0x2c] sm:$0xf]
        %v306 = vld [vmem:[%s253 + $0x30] sm:$0xf]
        %v307 = vld [vmem:[%s253 + $0x34] sm:$0xf]
        %v308 = vld [vmem:[%s253 + $0x38] sm:$0xf]
        %v309 = vld [vmem:[%s253 + $0x3c] sm:$0xf]
        %v310 = vld [vmem:[%s253 + $0x40] sm:$0xf]
        %v311 = vld [vmem:[%s253 + $0x44] sm:$0xf]
        %v312 = vld [vmem:[%s253 + $0x48] sm:$0xf]
        %v313 = vld [vmem:[%s253 + $0x4c] sm:$0xf]
        %v346 = vunpack.c.l.b16 %v262
        %v347 = vunpack.c.h.b16 %v262
        %v348 = vunpack.c.l.b16 %v263
        %v349 = vunpack.c.h.b16 %v263
        %v350 = vunpack.c.l.b16 %v264
        %v351 = vunpack.c.h.b16 %v264
        %v352 = vunpack.c.l.b16 %v265
        %v353 = vunpack.c.h.b16 %v265
        %v354 = vunpack.c.l.b16 %v266
        %v355 = vunpack.c.h.b16 %v266
        %v356 = vunpack.c.l.b16 %v267
        %v357 = vunpack.c.h.b16 %v267
        %v358 = vunpack.c.l.b16 %v268
        %v359 = vunpack.c.h.b16 %v268
        %v360 = vunpack.c.l.b16 %v269
        %v361 = vunpack.c.h.b16 %v269
        %v362 = vunpack.c.l.b16 %v270
        %v363 = vunpack.c.h.b16 %v270
        %v364 = vunpack.c.l.b16 %v271
        %v365 = vunpack.c.h.b16 %v271
        %v366 = vunpack.c.l.b16 %v272
        %v367 = vunpack.c.h.b16 %v272
        %v368 = vunpack.c.l.b16 %v273
        %v369 = vunpack.c.h.b16 %v273
        %v370 = vunpack.c.l.b16 %v274
        %v371 = vunpack.c.h.b16 %v274
        %v372 = vunpack.c.l.b16 %v275
        %v373 = vunpack.c.h.b16 %v275
        %v374 = vunpack.c.l.b16 %v276
        %v375 = vunpack.c.h.b16 %v276
        %v376 = vunpack.c.l.b16 %v277
        %v377 = vunpack.c.h.b16 %v277
        %v378 = vunpack.c.l.b16 %v278
        %v379 = vunpack.c.h.b16 %v278
        %v380 = vunpack.c.l.b16 %v279
        %v381 = vunpack.c.h.b16 %v279
        %v382 = vunpack.c.l.b16 %v280
        %v383 = vunpack.c.h.b16 %v280
        %v384 = vunpack.c.l.b16 %v281
        %v385 = vunpack.c.h.b16 %v281
        %v386 = vunpack.c.l.b16 %v282
        %v387 = vunpack.c.h.b16 %v282
        %v388 = vunpack.c.l.b16 %v283
        %v389 = vunpack.c.h.b16 %v283
        %v390 = vunpack.c.l.b16 %v284
        %v391 = vunpack.c.h.b16 %v284
        %v392 = vunpack.c.l.b16 %v285
        %v393 = vunpack.c.h.b16 %v285
        %v394 = vunpack.c.l.b16 %v286
        %v395 = vunpack.c.h.b16 %v286
        %v396 = vunpack.c.l.b16 %v287
        %v397 = vunpack.c.h.b16 %v287
        %v398 = vunpack.c.l.b16 %v288
        %v399 = vunpack.c.h.b16 %v288
        %v400 = vunpack.c.l.b16 %v289
        %v401 = vunpack.c.h.b16 %v289
        %v402 = vunpack.c.l.b16 %v290
        %v403 = vunpack.c.h.b16 %v290
        %v404 = vunpack.c.l.b16 %v291
        %v405 = vunpack.c.h.b16 %v291
        %v406 = vunpack.c.l.b16 %v292
        %v407 = vunpack.c.h.b16 %v292
        %v408 = vunpack.c.l.b16 %v293
        %v409 = vunpack.c.h.b16 %v293
        %v410 = vpack.c.b16 %v348, %v346
        %v411 = vpack.c.b16 %v349, %v347
        %v412 = vpack.c.b16 %v352, %v350
        %v413 = vpack.c.b16 %v353, %v351
        %v414 = vpack.c.b16 %v356, %v354
        %v415 = vpack.c.b16 %v357, %v355
        %v416 = vpack.c.b16 %v360, %v358
        %v417 = vpack.c.b16 %v361, %v359
        %v418 = vpack.c.b16 %v364, %v362
        %v419 = vpack.c.b16 %v365, %v363
        %v420 = vpack.c.b16 %v368, %v366
        %v421 = vpack.c.b16 %v369, %v367
        %v422 = vpack.c.b16 %v372, %v370
        %v423 = vpack.c.b16 %v373, %v371
        %v424 = vpack.c.b16 %v376, %v374
        %v425 = vpack.c.b16 %v377, %v375
        %v426 = vpack.c.b16 %v380, %v378
        %v427 = vpack.c.b16 %v381, %v379
        %v428 = vpack.c.b16 %v384, %v382
        %v429 = vpack.c.b16 %v385, %v383
        %v430 = vpack.c.b16 %v388, %v386
        %v431 = vpack.c.b16 %v389, %v387
        %v432 = vpack.c.b16 %v392, %v390
        %v433 = vpack.c.b16 %v393, %v391
        %v434 = vpack.c.b16 %v396, %v394
        %v435 = vpack.c.b16 %v397, %v395
        %v436 = vpack.c.b16 %v400, %v398
        %v437 = vpack.c.b16 %v401, %v399
        %v438 = vpack.c.b16 %v404, %v402
        %v439 = vpack.c.b16 %v405, %v403
        %v440 = vpack.c.b16 %v408, %v406
        %v441 = vpack.c.b16 %v409, %v407
        %v478 = vunpack.c.l.b16 %v294
        %v479 = vunpack.c.l.b16 %v295
        %v480 = vunpack.c.l.b16 %v296
        %v481 = vunpack.c.l.b16 %v297
        %v482 = vunpack.c.l.b16 %v298
        %v483 = vunpack.c.l.b16 %v299
        %v484 = vunpack.c.l.b16 %v300
        %v485 = vunpack.c.l.b16 %v301
        %v486 = vunpack.c.l.b16 %v302
        %v487 = vunpack.c.l.b16 %v303
        %v488 = vunpack.c.l.b16 %v304
        %v489 = vunpack.c.l.b16 %v305
        %v490 = vunpack.c.l.b16 %v306
        %v491 = vunpack.c.l.b16 %v307
        %v492 = vunpack.c.l.b16 %v308
        %v493 = vunpack.c.l.b16 %v309
        %v494 = vunpack.c.l.b16 %v310
        %v495 = vunpack.c.l.b16 %v311
        %v496 = vunpack.c.l.b16 %v312
        %v497 = vunpack.c.l.b16 %v313
        %v498 = vpack.c.b16 %v479, %v478
        %v499 = vpack.c.b16 %v481, %v480
        %v500 = vpack.c.b16 %v483, %v482
        %v501 = vpack.c.b16 %v485, %v484
        %v502 = vpack.c.b16 %v487, %v486
        %v503 = vpack.c.b16 %v489, %v488
        %v504 = vpack.c.b16 %v491, %v490
        %v505 = vpack.c.b16 %v493, %v492
        %v506 = vpack.c.b16 %v495, %v494
        %v507 = vpack.c.b16 %v497, %v496
        %vm518 = vcmask 261120
        %v520 = vsel %vm518, %v411, 0
        %v523 = vsel %vm518, %v413, 0
        %v526 = vsel %vm518, %v415, 0
        %v529 = vsel %vm518, %v417, 0
        %v532 = vsel %vm518, %v419, 0
        %v535 = vsel %vm518, %v421, 0
        %v538 = vsel %vm518, %v423, 0
        %v541 = vsel %vm518, %v425, 0
        %v544 = vsel %vm518, %v427, 0
        %v547 = vsel %vm518, %v429, 0
        %v550 = vsel %vm518, %v431, 0
        %v553 = vsel %vm518, %v433, 0
        %v556 = vsel %vm518, %v435, 0
        %v559 = vsel %vm518, %v437, 0
        %v562 = vsel %vm518, %v439, 0
        %v565 = vsel %vm518, %v441, 0
        %567 = vmatprep.subr.bf16.mxu0 0
        %568 = vmatpush1.bf16.msra.mxu0 %v505
        %569 = vmatprep.subr.bf16.mxu0 0
        %570 = vmatpush1.bf16.msra.mxu0 %v504
        %571 = vmatprep.subr.bf16.mxu0 0
        %572 = vmatpush1.bf16.msra.mxu0 %v503
        %573 = vmatprep.subr.bf16.mxu0 0
        %574 = vmatpush1.bf16.msra.mxu0 %v502
        %575 = vmatprep.subr.bf16.mxu0 0
        %576 = vmatpush1.bf16.msra.mxu0 %v501
        %577 = vmatprep.subr.bf16.mxu0 0
        %578 = vmatpush1.bf16.msra.mxu0 %v500
        %579 = vmatprep.subr.bf16.mxu0 0
        %580 = vmatpush1.bf16.msra.mxu0 %v499
        %581 = vmatprep.subr.bf16.mxu0 0
        %582 = vmatpush1.bf16.msra.mxu0 %v498
        %583 = vmatprep.subr.bf16.mxu0 0
        %584 = vmatpush2.bf16.msra.mxu0 0
        %585 = vmatprep.subr.bf16.mxu0 0
        %586 = vmatpush2.bf16.msra.mxu0 0
        %587 = vmatprep.subr.bf16.mxu0 0
        %588 = vmatpush2.bf16.msra.mxu0 0
        %589 = vmatprep.subr.bf16.mxu0 0
        %590 = vmatpush2.bf16.msra.mxu0 0
        %591 = vmatprep.subr.bf16.mxu0 0
        %592 = vmatpush2.bf16.msra.mxu0 0
        %593 = vmatprep.subr.bf16.mxu0 0
        %594 = vmatpush2.bf16.msra.mxu0 0
        %595 = vmatprep.subr.bf16.mxu0 0
        %596 = vmatpush2.bf16.msra.mxu0 %v507
        %597 = vmatprep.subr.bf16.mxu0 0
        %598 = vmatpush2.bf16.msra.mxu0 %v506
        %599 = vmatprep.mubr.bf16.mxu0 %v520
        %600 = vmatmul.mubr.bf16.gmra.mxu0 %v410
        %v601 = vpop.f32.mrf.mxu0
        %v602 = vadd.f32 0.0, %v601
        %v603 = vpop.f32.mrf.mxu0
        %v604 = vpop.f32.mrf.mxu0
        %v605 = vadd.f32 0.0, %v604
        %v606 = vpop.f32.mrf.mxu0
        %607 = vmatprep.mubr.bf16.mxu0 %v523
        %608 = vmatmul.mubr.bf16.gmra.mxu0 %v412
        %v609 = vpop.f32.mrf.mxu0
        %v610 = vadd.f32 0.0, %v609
        %v611 = vpop.f32.mrf.mxu0
        %v612 = vpop.f32.mrf.mxu0
        %v613 = vadd.f32 0.0, %v612
        %v614 = vpop.f32.mrf.mxu0
        %615 = vmatprep.mubr.bf16.mxu0 %v526
        %616 = vmatmul.mubr.bf16.gmra.mxu0 %v414
        %v617 = vpop.f32.mrf.mxu0
        %v618 = vadd.f32 0.0, %v617
        %v619 = vpop.f32.mrf.mxu0
        %v620 = vpop.f32.mrf.mxu0
        %v621 = vadd.f32 0.0, %v620
        %v622 = vpop.f32.mrf.mxu0
        %623 = vmatprep.mubr.bf16.mxu0 %v529
        %624 = vmatmul.mubr.bf16.gmra.mxu0 %v416
        %v625 = vpop.f32.mrf.mxu0
        %v626 = vadd.f32 0.0, %v625
        %v627 = vpop.f32.mrf.mxu0
        %v628 = vpop.f32.mrf.mxu0
        %v629 = vadd.f32 0.0, %v628
        %v630 = vpop.f32.mrf.mxu0
        %631 = vmatprep.mubr.bf16.mxu0 %v532
        %632 = vmatmul.mubr.bf16.gmra.mxu0 %v418
        %v633 = vpop.f32.mrf.mxu0
        %v634 = vadd.f32 0.0, %v633
        %v635 = vpop.f32.mrf.mxu0
        %v636 = vpop.f32.mrf.mxu0
        %v637 = vadd.f32 0.0, %v636
        %v638 = vpop.f32.mrf.mxu0
        %639 = vmatprep.mubr.bf16.mxu0 %v535
        %640 = vmatmul.mubr.bf16.gmra.mxu0 %v420
        %v641 = vpop.f32.mrf.mxu0
        %v642 = vadd.f32 0.0, %v641
        %v643 = vpop.f32.mrf.mxu0
        %v644 = vpop.f32.mrf.mxu0
        %v645 = vadd.f32 0.0, %v644
        %v646 = vpop.f32.mrf.mxu0
        %647 = vmatprep.mubr.bf16.mxu0 %v538
        %648 = vmatmul.mubr.bf16.gmra.mxu0 %v422
        %v649 = vpop.f32.mrf.mxu0
        %v650 = vadd.f32 0.0, %v649
        %v651 = vpop.f32.mrf.mxu0
        %v652 = vpop.f32.mrf.mxu0
        %v653 = vadd.f32 0.0, %v652
        %v654 = vpop.f32.mrf.mxu0
        %655 = vmatprep.mubr.bf16.mxu0 %v541
        %656 = vmatmul.mubr.bf16.gmra.mxu0 %v424
        %v657 = vpop.f32.mrf.mxu0
        %v658 = vadd.f32 0.0, %v657
        %v659 = vpop.f32.mrf.mxu0
        %v660 = vpop.f32.mrf.mxu0
        %v661 = vadd.f32 0.0, %v660
        %v662 = vpop.f32.mrf.mxu0
        %663 = vmatprep.mubr.bf16.mxu0 %v544
        %664 = vmatmul.mubr.bf16.gmra.mxu0 %v426
        %v665 = vpop.f32.mrf.mxu0
        %v666 = vadd.f32 0.0, %v665
        %v667 = vpop.f32.mrf.mxu0
        %v668 = vpop.f32.mrf.mxu0
        %v669 = vadd.f32 0.0, %v668
        %v670 = vpop.f32.mrf.mxu0
        %671 = vmatprep.mubr.bf16.mxu0 %v547
        %672 = vmatmul.mubr.bf16.gmra.mxu0 %v428
        %v673 = vpop.f32.mrf.mxu0
        %v674 = vadd.f32 0.0, %v673
        %v675 = vpop.f32.mrf.mxu0
        %v676 = vpop.f32.mrf.mxu0
        %v677 = vadd.f32 0.0, %v676
        %v678 = vpop.f32.mrf.mxu0
        %679 = vmatprep.mubr.bf16.mxu0 %v550
        %680 = vmatmul.mubr.bf16.gmra.mxu0 %v430
        %v681 = vpop.f32.mrf.mxu0
        %v682 = vadd.f32 0.0, %v681
        %v683 = vpop.f32.mrf.mxu0
        %v684 = vpop.f32.mrf.mxu0
        %v685 = vadd.f32 0.0, %v684
        %v686 = vpop.f32.mrf.mxu0
        %687 = vmatprep.mubr.bf16.mxu0 %v553
        %688 = vmatmul.mubr.bf16.gmra.mxu0 %v432
        %v689 = vpop.f32.mrf.mxu0
        %v690 = vadd.f32 0.0, %v689
        %v691 = vpop.f32.mrf.mxu0
        %v692 = vpop.f32.mrf.mxu0
        %v693 = vadd.f32 0.0, %v692
        %v694 = vpop.f32.mrf.mxu0
        %695 = vmatprep.mubr.bf16.mxu0 %v556
        %696 = vmatmul.mubr.bf16.gmra.mxu0 %v434
        %v697 = vpop.f32.mrf.mxu0
        %v698 = vadd.f32 0.0, %v697
        %v699 = vpop.f32.mrf.mxu0
        %v700 = vpop.f32.mrf.mxu0
        %v701 = vadd.f32 0.0, %v700
        %v702 = vpop.f32.mrf.mxu0
        %703 = vmatprep.mubr.bf16.mxu0 %v559
        %704 = vmatmul.mubr.bf16.gmra.mxu0 %v436
        %v705 = vpop.f32.mrf.mxu0
        %v706 = vadd.f32 0.0, %v705
        %v707 = vpop.f32.mrf.mxu0
        %v708 = vpop.f32.mrf.mxu0
        %v709 = vadd.f32 0.0, %v708
        %v710 = vpop.f32.mrf.mxu0
        %711 = vmatprep.mubr.bf16.mxu0 %v562
        %712 = vmatmul.mubr.bf16.gmra.mxu0 %v438
        %v713 = vpop.f32.mrf.mxu0
        %v714 = vadd.f32 0.0, %v713
        %v715 = vpop.f32.mrf.mxu0
        %v716 = vpop.f32.mrf.mxu0
        %v717 = vadd.f32 0.0, %v716
        %v718 = vpop.f32.mrf.mxu0
        %719 = vmatprep.mubr.bf16.mxu0 %v565
        %720 = vmatmul.mubr.bf16.gmra.mxu0 %v440
        %v721 = vpop.f32.mrf.mxu0
        %v722 = vadd.f32 0.0, %v721
        %v723 = vpop.f32.mrf.mxu0
        %v724 = vpop.f32.mrf.mxu0
        %v725 = vadd.f32 0.0, %v724
        %v726 = vpop.f32.mrf.mxu0
        %727 = vdwg.mxu0
        %v728 = vld [vmem:[%s256] sm:$0x1]
        %v730 = vlaneseq
        %v731 = vshrl.u32 %v730, 7
        %v732 = vsub.s32 0, %v731
        %v733 = vrot.slane %v728, %v732
        %v735 = vmul.f32 %v602, %v733
        %v736 = vmul.f32 %v605, %v733
        %v737 = vmul.f32 %v610, %v733
        %v738 = vmul.f32 %v613, %v733
        %v739 = vmul.f32 %v618, %v733
        %v740 = vmul.f32 %v621, %v733
        %v741 = vmul.f32 %v626, %v733
        %v742 = vmul.f32 %v629, %v733
        %v743 = vmul.f32 %v634, %v733
        %v744 = vmul.f32 %v637, %v733
        %v745 = vmul.f32 %v642, %v733
        %v746 = vmul.f32 %v645, %v733
        %v747 = vmul.f32 %v650, %v733
        %v748 = vmul.f32 %v653, %v733
        %v749 = vmul.f32 %v658, %v733
        %v750 = vmul.f32 %v661, %v733
        %v751 = vmul.f32 %v666, %v733
        %v752 = vmul.f32 %v669, %v733
        %v753 = vmul.f32 %v674, %v733
        %v754 = vmul.f32 %v677, %v733
        %v755 = vmul.f32 %v682, %v733
        %v756 = vmul.f32 %v685, %v733
        %v757 = vmul.f32 %v690, %v733
        %v758 = vmul.f32 %v693, %v733
        %v759 = vmul.f32 %v698, %v733
        %v760 = vmul.f32 %v701, %v733
        %v761 = vmul.f32 %v706, %v733
        %v762 = vmul.f32 %v709, %v733
        %v763 = vmul.f32 %v714, %v733
        %v764 = vmul.f32 %v717, %v733
        %v765 = vmul.f32 %v722, %v733
        %v766 = vmul.f32 %v725, %v733
        %v767 = vld [vmem:[%s259] sm:$0x1]
        %v769 = vlaneseq
        %v770 = vshrl.u32 %v769, 7
        %v771 = vsub.s32 0, %v770
        %v772 = vrot.slane %v767, %v771
        %v774 = vadd.f32 %v735, %v772
        %v775 = vadd.f32 %v736, %v772
        %v776 = vadd.f32 %v737, %v772
        %v777 = vadd.f32 %v738, %v772
        %v778 = vadd.f32 %v739, %v772
        %v779 = vadd.f32 %v740, %v772
        %v780 = vadd.f32 %v741, %v772
        %v781 = vadd.f32 %v742, %v772
        %v782 = vadd.f32 %v743, %v772
        %v783 = vadd.f32 %v744, %v772
        %v784 = vadd.f32 %v745, %v772
        %v785 = vadd.f32 %v746, %v772
        %v786 = vadd.f32 %v747, %v772
        %v787 = vadd.f32 %v748, %v772
        %v788 = vadd.f32 %v749, %v772
        %v789 = vadd.f32 %v750, %v772
        %v790 = vadd.f32 %v751, %v772
        %v791 = vadd.f32 %v752, %v772
        %v792 = vadd.f32 %v753, %v772
        %v793 = vadd.f32 %v754, %v772
        %v794 = vadd.f32 %v755, %v772
        %v795 = vadd.f32 %v756, %v772
        %v796 = vadd.f32 %v757, %v772
        %v797 = vadd.f32 %v758, %v772
        %v798 = vadd.f32 %v759, %v772
        %v799 = vadd.f32 %v760, %v772
        %v800 = vadd.f32 %v761, %v772
        %v801 = vadd.f32 %v762, %v772
        %v802 = vadd.f32 %v763, %v772
        %v803 = vadd.f32 %v764, %v772
        %v804 = vadd.f32 %v765, %v772
        %v805 = vadd.f32 %v766, %v772
        %v806 = vpack.c.bf16 %v775, %v774
        %v807 = vpack.c.bf16 %v777, %v776
        %v808 = vpack.c.bf16 %v779, %v778
        %v809 = vpack.c.bf16 %v781, %v780
        %v810 = vpack.c.bf16 %v783, %v782
        %v811 = vpack.c.bf16 %v785, %v784
        %v812 = vpack.c.bf16 %v787, %v786
        %v813 = vpack.c.bf16 %v789, %v788
        %v814 = vpack.c.bf16 %v791, %v790
        %v815 = vpack.c.bf16 %v793, %v792
        %v816 = vpack.c.bf16 %v795, %v794
        %v817 = vpack.c.bf16 %v797, %v796
        %v818 = vpack.c.bf16 %v799, %v798
        %v819 = vpack.c.bf16 %v801, %v800
        %v820 = vpack.c.bf16 %v803, %v802
        %v821 = vpack.c.bf16 %v805, %v804
        %v838 = vunpack.c.l.b16 %v806
        %v839 = vunpack.c.h.b16 %v806
        %v840 = vunpack.c.l.b16 %v807
        %v841 = vunpack.c.h.b16 %v807
        %v842 = vunpack.c.l.b16 %v808
        %v843 = vunpack.c.h.b16 %v808
        %v844 = vunpack.c.l.b16 %v809
        %v845 = vunpack.c.h.b16 %v809
        %v846 = vunpack.c.l.b16 %v810
        %v847 = vunpack.c.h.b16 %v810
        %v848 = vunpack.c.l.b16 %v811
        %v849 = vunpack.c.h.b16 %v811
        %v850 = vunpack.c.l.b16 %v812
        %v851 = vunpack.c.h.b16 %v812
        %v852 = vunpack.c.l.b16 %v813
        %v853 = vunpack.c.h.b16 %v813
        %v854 = vunpack.c.l.b16 %v814
        %v855 = vunpack.c.h.b16 %v814
        %v856 = vunpack.c.l.b16 %v815
        %v857 = vunpack.c.h.b16 %v815
        %v858 = vunpack.c.l.b16 %v816
        %v859 = vunpack.c.h.b16 %v816
        %v860 = vunpack.c.l.b16 %v817
        %v861 = vunpack.c.h.b16 %v817
        %v862 = vunpack.c.l.b16 %v818
        %v863 = vunpack.c.h.b16 %v818
        %v864 = vunpack.c.l.b16 %v819
        %v865 = vunpack.c.h.b16 %v819
        %v866 = vunpack.c.l.b16 %v820
        %v867 = vunpack.c.h.b16 %v820
        %v868 = vunpack.c.l.b16 %v821
        %v869 = vunpack.c.h.b16 %v821
        %v870 = vpack.c.b16 %v838, %v838
        %v871 = vpack.c.b16 %v839, %v839
        %v872 = vpack.c.b16 %v840, %v840
        %v873 = vpack.c.b16 %v841, %v841
        %v874 = vpack.c.b16 %v842, %v842
        %v875 = vpack.c.b16 %v843, %v843
        %v876 = vpack.c.b16 %v844, %v844
        %v877 = vpack.c.b16 %v845, %v845
        %v878 = vpack.c.b16 %v846, %v846
        %v879 = vpack.c.b16 %v847, %v847
        %v880 = vpack.c.b16 %v848, %v848
        %v881 = vpack.c.b16 %v849, %v849
        %v882 = vpack.c.b16 %v850, %v850
        %v883 = vpack.c.b16 %v851, %v851
        %v884 = vpack.c.b16 %v852, %v852
        %v885 = vpack.c.b16 %v853, %v853
        %v886 = vpack.c.b16 %v854, %v854
        %v887 = vpack.c.b16 %v855, %v855
        %v888 = vpack.c.b16 %v856, %v856
        %v889 = vpack.c.b16 %v857, %v857
        %v890 = vpack.c.b16 %v858, %v858
        %v891 = vpack.c.b16 %v859, %v859
        %v892 = vpack.c.b16 %v860, %v860
        %v893 = vpack.c.b16 %v861, %v861
        %v894 = vpack.c.b16 %v862, %v862
        %v895 = vpack.c.b16 %v863, %v863
        %v896 = vpack.c.b16 %v864, %v864
        %v897 = vpack.c.b16 %v865, %v865
        %v898 = vpack.c.b16 %v866, %v866
        %v899 = vpack.c.b16 %v867, %v867
        %v900 = vpack.c.b16 %v868, %v868
        %v901 = vpack.c.b16 %v869, %v869
        %934 = vst [vmem:[%s242] sm:$0xf] %v870
        %935 = vst [vmem:[%s242 + $0x4] sm:$0xf] %v871
        %936 = vst [vmem:[%s242 + $0x8] sm:$0xf] %v872
        %937 = vst [vmem:[%s242 + $0xc] sm:$0xf] %v873
        %938 = vst [vmem:[%s242 + $0x10] sm:$0xf] %v874
        %939 = vst [vmem:[%s242 + $0x14] sm:$0xf] %v875
        %940 = vst [vmem:[%s242 + $0x18] sm:$0xf] %v876
        %941 = vst [vmem:[%s242 + $0x1c] sm:$0xf] %v877
        %942 = vst [vmem:[%s242 + $0x20] sm:$0xf] %v878
        %943 = vst [vmem:[%s242 + $0x24] sm:$0xf] %v879
        %944 = vst [vmem:[%s242 + $0x28] sm:$0xf] %v880
        %945 = vst [vmem:[%s242 + $0x2c] sm:$0xf] %v881
        %946 = vst [vmem:[%s242 + $0x30] sm:$0xf] %v882
        %947 = vst [vmem:[%s242 + $0x34] sm:$0xf] %v883
        %948 = vst [vmem:[%s242 + $0x38] sm:$0xf] %v884
        %949 = vst [vmem:[%s242 + $0x3c] sm:$0xf] %v885
        %950 = vst [vmem:[%s242 + $0x40] sm:$0xf] %v886
        %951 = vst [vmem:[%s242 + $0x44] sm:$0xf] %v887
        %952 = vst [vmem:[%s242 + $0x48] sm:$0xf] %v888
        %953 = vst [vmem:[%s242 + $0x4c] sm:$0xf] %v889
        %954 = vst [vmem:[%s242 + $0x50] sm:$0xf] %v890
        %955 = vst [vmem:[%s242 + $0x54] sm:$0xf] %v891
        %956 = vst [vmem:[%s242 + $0x58] sm:$0xf] %v892
        %957 = vst [vmem:[%s242 + $0x5c] sm:$0xf] %v893
        %958 = vst [vmem:[%s242 + $0x60] sm:$0xf] %v894
        %959 = vst [vmem:[%s242 + $0x64] sm:$0xf] %v895
        %960 = vst [vmem:[%s242 + $0x68] sm:$0xf] %v896
        %961 = vst [vmem:[%s242 + $0x6c] sm:$0xf] %v897
        %962 = vst [vmem:[%s242 + $0x70] sm:$0xf] %v898
        %963 = vst [vmem:[%s242 + $0x74] sm:$0xf] %v899
        %964 = vst [vmem:[%s242 + $0x78] sm:$0xf] %v900
        %965 = vst [vmem:[%s242 + $0x7c] sm:$0xf] %v901
        %s966 = sand.u32 %s144, 1
        %s967 = scalar_lea.sflag [#allocation3], %s966
        %s968 = sand.u32 %s144, 1
        %s969 = smul.addr %s968, 128
        %s970 = scalar_lea.vmem [#allocation2], %s969
        // Predicated region
        $region37: #{conv_bn.1} parent=35 // pred_check
          %p971 = pneg %p154
        $region38: #{conv_bn.1} parent=35 // pred_check_branch
          %973 = sbr.rel (%p971) target = $region40
        $region39: #{conv_bn.1} parent=35 // pred_region
          %s974 = smul.u32 32, %s22
          %s976 = ssub.s32 2048, 2048
          %977 = vsyncadd %s967, %s976
          %s978 = sadd.s32 %s23, %s974
          %s979 = smul.addr %s978, 64
          %s980 = scalar_lea.hbm %s4, %s979
          %s981 = sshll.u32 %s970, 4
          %s982 = int_to_ptr.vmem [resolvable:$true] %s981
          %987 = dma.vmem_to_hbm [thread:$0]  %s982, 2048, %s980, %s967, 64, 64, 4
        $region40: #{conv_bn.1} parent=35 // pred_fallthru
          _
      $region36: #{conv_bn.1} parent=5 // pred_fallthru
        _
      %p988 = scmp.le.s32.totalorder 2, %s13
      // Predicated region
      $region41: #{conv_bn.1} parent=5 // pred_check
        %p989 = pneg %p988
      $region42: #{conv_bn.1} parent=5 // pred_check_branch
        %991 = sbr.rel (%p989) target = $region44
      $region43: #{conv_bn.1} parent=5 // pred_region
        %s992 = ssub.s32 %s13, 2
        // Predicated region
        $region45: #{conv_bn.1} parent=43 // pred_check
          %p993 = pneg %p160
        $region46: #{conv_bn.1} parent=43 // pred_check_branch
          %995 = sbr.rel (%p993) target = $region48
        $region47: #{conv_bn.1} parent=43 // pred_region
          %s996 = sand.u32 %s145, 1
          %s997 = scalar_lea.sflag [#allocation3], %s996
          %s998 = sand.u32 %s145, 1
          %s999 = smul.addr %s998, 128
          %s1000 = scalar_lea.vmem [#allocation2], %s999
          %1001 = dma.done %s997, 2048
        $region48: #{conv_bn.1} parent=43 // pred_fallthru
          _
      $region44: #{conv_bn.1} parent=5 // pred_fallthru
        _
    $region6: #{conv_bn.1} parent=1 // loop_footer
      %s17 = sadd.s32 1, %s13
    $region7: #{conv_bn.1} parent=1 // loop_footer_branch
      %12 = sbr.rel target = $region3
    $region8: #{conv_bn.1} parent=1 // loop_exit
      _
    %1002 = vsyncpa [#allocation3], 1
    %s1003 = scalar_lea.sflag [#allocation3], 1
    %1004 = vsyncpa %s1003, 1

</llo_original>
